<compile_context>
chip_gen: v7x
topology: tpu7x:2x2x1
jax: 0.10.0
libtpu: 0.0.40
codegen_flags: <defaults>
</compile_context>

<pallas_src>
import math

import jax
import jax.numpy as jnp
from jax.experimental import pallas as pl
from jax.experimental.pallas import tpu as pltpu


def _round_up(a: int, m: int) -> int:
    return ((a + m - 1) // m) * m


def _ssnn_block_kernel(at_ref, bdt_ref, ct_ref, x0_ref, u_ref, y_ref,
                       x_state, ubd_ref, xs_ref):
    """One grid step == one block of T timesteps.

    at_ref  : (x_p, x_p)            A^T           (zero padded)
    bdt_ref : (u_p, x_p + y_p)      [B^T | D^T]   (fused, zero padded)
    ct_ref  : (x_p, y_p)            C^T           (zero padded)
    x0_ref  : (b_p, x_p)            initial state, batch-major
    u_ref   : (T, b_p, u_p)         time-major input block
    y_ref   : (T, b_p, y_p)         time-major output block
    x_state : VMEM (b_p, x_p)       recurrent state (persists across grid steps)
    ubd_ref : VMEM (T*b_p, x_p+y_p) u @ [B^T|D^T] for the whole block
    xs_ref  : VMEM (T*b_p, x_p)     x[t] for every step of the block
    """
    s = pl.program_id(0)

    @pl.when(s == 0)
    def _():
        x_state[...] = x0_ref[...]

    T, b_p, u_p = u_ref.shape
    x_p = at_ref.shape[0]
    y_p = ct_ref.shape[1]

    # (1) Hoisted input projection: one big MXU matmul for the whole T-block.
    u_2d = u_ref[...].reshape(T * b_p, u_p)          # layout-preserving (b_p % 8 == 0)
    ubd_ref[...] = jnp.dot(u_2d, bdt_ref[...], preferred_element_type=jnp.float32)

    # (2) Serial recurrence: only x <- x @ A^T + (u @ B^T)[t] stays on the critical path.
    at = at_ref[...]
    x = x_state[...]
    for t in range(T):                               # static unroll (T is compile-time)
        ub_t = ubd_ref[t * b_p:(t + 1) * b_p, 0:x_p]          # (b_p, x_p), contiguous
        x = jnp.dot(x, at, preferred_element_type=jnp.float32) + ub_t
        xs_ref[t * b_p:(t + 1) * b_p, :] = x
    x_state[...] = x

    # (3) Hoisted output projection: one big MXU matmul + precomputed u @ D^T.
    y2 = jnp.dot(xs_ref[...], ct_ref[...], preferred_element_type=jnp.float32)
    y2 = y2 + ubd_ref[:, x_p:]
    y_ref[...] = y2.reshape(T, b_p, y_p).astype(y_ref.dtype)


def ssnn_forward(params, u, x0=None, block_t=None):
    """Pallas SSNN forward.

    params : dict with A (x,x), B (x,u), C (y,x), D (y,u)   (PyTorch conventions)
    u      : (batch, seq, u_len)
    x0     : optional (x_len, batch) initial state (PyTorch convention) or None.
    returns: (batch, seq, y_len)
    """
    A, B, C, D = params["A"], params["B"], params["C"], params["D"]
    x_len = A.shape[0]
    u_len = B.shape[1]
    y_len = C.shape[0]

    batch, seq, in_size = u.shape
    if in_size != u_len:
        raise ValueError("Size of input different than model input size")

    f32 = jnp.float32

    # Padded, TPU-friendly sizes: lanes multiple of 128, sublanes multiple of 8.
    x_p = _round_up(x_len, 128)
    u_p = _round_up(u_len, 128)
    y_p = _round_up(y_len, 128)
    b_p = _round_up(batch, 8)

    if block_t is None:
        block_t = min(64, seq)                 # timesteps per grid step
    block_t = max(1, int(block_t))
    seq_p = _round_up(seq, block_t)

    # Zero-padded, transposed weights (padding never feeds back into the real state).
    At = jnp.zeros((x_p, x_p), f32).at[:x_len, :x_len].set(jnp.asarray(A, f32).T)
    BDt = jnp.zeros((u_p, x_p + y_p), f32)
    BDt = BDt.at[:u_len, :x_len].set(jnp.asarray(B, f32).T)                 # B^T
    BDt = BDt.at[:u_len, x_p:x_p + y_len].set(jnp.asarray(D, f32).T)        # D^T
    Ct = jnp.zeros((x_p, y_p), f32).at[:x_len, :y_len].set(jnp.asarray(C, f32).T)

    # Time-major, padded input block layout for the kernel: (seq_p, b_p, u_p).
    u_tm = jnp.zeros((seq_p, b_p, u_p), f32).at[:seq, :batch, :u_len].set(
        jnp.transpose(jnp.asarray(u, f32), (1, 0, 2)))

    if x0 is None:
        x0_bm = jnp.zeros((b_p, x_p), f32)
    else:
        x0_bm = jnp.zeros((b_p, x_p), f32).at[:batch, :x_len].set(
            jnp.asarray(x0, f32).T)            # (x_len, batch) -> (batch, x_len)

    grid = (seq_p // block_t,)

    grid_spec = pltpu.PrefetchScalarGridSpec(
        num_scalar_prefetch=0,
        grid=grid,
        in_specs=[
            pl.BlockSpec((x_p, x_p), lambda s: (0, 0)),            # A^T (resident)
            pl.BlockSpec((u_p, x_p + y_p), lambda s: (0, 0)),      # [B^T | D^T]
            pl.BlockSpec((x_p, y_p), lambda s: (0, 0)),            # C^T
            pl.BlockSpec((b_p, x_p), lambda s: (0, 0)),            # x0
            pl.BlockSpec((block_t, b_p, u_p), lambda s: (s, 0, 0)),   # u block
        ],
        out_specs=pl.BlockSpec((block_t, b_p, y_p), lambda s: (s, 0, 0)),
        scratch_shapes=[
            pltpu.VMEM((b_p, x_p), jnp.float32),                       # recurrent state
            pltpu.VMEM((block_t * b_p, x_p + y_p), jnp.float32),       # u @ [B^T|D^T]
            pltpu.VMEM((block_t * b_p, x_p), jnp.float32),             # per-step states
        ],
    )

    y_tm = pl.pallas_call(
        _ssnn_block_kernel,
        out_shape=jax.ShapeDtypeStruct((seq_p, b_p, y_p), f32),
        grid_spec=grid_spec,
        compiler_params=pltpu.CompilerParams(
            # Recurrence over time => the (single) grid axis must run sequentially.
            dimension_semantics=("arbitrary",),
        ),
    )(At, BDt, Ct, x0_bm, u_tm)

    # Slice off padding, then back to (batch, seq, y_len) as the torch module returns.
    return jnp.transpose(y_tm[:seq, :batch, :y_len], (1, 0, 2))


def init_ssnn_params(key, u_len, x_len, y_len):
    """Deterministic init matching torch: uniform(-1/sqrt(x_len), 1/sqrt(x_len))."""
    stdv = 1.0 / math.sqrt(x_len)
    kA, kB, kC, kD = jax.random.split(key, 4)
    return {
        "A": jax.random.uniform(kA, (x_len, x_len), jnp.float32, -stdv, stdv),
        "B": jax.random.uniform(kB, (x_len, u_len), jnp.float32, -stdv, stdv),
        "C": jax.random.uniform(kC, (y_len, x_len), jnp.float32, -stdv, stdv),
        "D": jax.random.uniform(kD, (y_len, u_len), jnp.float32, -stdv, stdv),
    }


def _reference_forward(params, u, x0=None):
    """Pure-JAX reference mirroring the PyTorch loop (for the correctness check)."""
    A, B, C, D = params["A"], params["B"], params["C"], params["D"]
    batch, seq, _ = u.shape
    x_len = A.shape[0]
    x = jnp.zeros((x_len, batch), jnp.float32) if x0 is None else jnp.asarray(x0, jnp.float32)

    def step(x, u_t):
        u_t = u_t.T                       # (u_len, batch)
        x = A @ x + B @ u_t
        y = C @ x + D @ u_t
        return x, y                       # y: (y_len, batch)

    _, ys = jax.lax.scan(step, x, jnp.transpose(u, (1, 0, 2)))   # (seq, y_len, batch)
    return jnp.transpose(ys, (2, 0, 1))                          # (batch, seq, y_len)


if __name__ == "__main__":
    # Case 1: small deterministic example, default time-block (single grid step).
    batch, seq, u_len, x_len, y_len = 2, 8, 4, 32, 4

    key = jax.random.PRNGKey(0)
    k_params, k_u, k_x0 = jax.random.split(key, 3)
    params = init_ssnn_params(k_params, u_len, x_len, y_len)
    u = jax.random.normal(k_u, (batch, seq, u_len), jnp.float32)

    y = jax.block_until_ready(ssnn_forward(params, u))
    y_ref = jax.block_until_ready(_reference_forward(params, u))
    assert y.shape == (batch, seq, y_len)
    assert jnp.allclose(y, y_ref, atol=1e-4, rtol=1e-4)

    # Case 2: non-trivial x0, odd batch/seq, explicit block_t so the recurrent state is
    # carried across multiple grid steps (exercises padding + the VMEM state carry).
    batch2, seq2 = 3, 13
    u2 = jax.random.normal(jax.random.PRNGKey(1), (batch2, seq2, u_len), jnp.float32)
    x0 = jax.random.normal(k_x0, (x_len, batch2), jnp.float32)
    y2 = jax.block_until_ready(ssnn_forward(params, u2, x0=x0, block_t=8))
    y2_ref = jax.block_until_ready(_reference_forward(params, u2, x0=x0))
    assert y2.shape == (batch2, seq2, y_len)
    assert jnp.allclose(y2, y2_ref, atol=1e-4, rtol=1e-4)

    print("KERNEL_OK")
</pallas_src>

<mosaic_0001>
module attributes {stable_mosaic.version = 11 : i64} {
  func.func @_ssnn_block_kernel(%arg0: i32, %arg1: memref<128x128xf32, #tpu.memory_space<vmem>>, %arg2: memref<128x256xf32, #tpu.memory_space<vmem>>, %arg3: memref<128x128xf32, #tpu.memory_space<vmem>>, %arg4: memref<8x128xf32, #tpu.memory_space<vmem>>, %arg5: memref<8x8x128xf32, #tpu.memory_space<vmem>>, %arg6: memref<8x8x128xf32, #tpu.memory_space<vmem>>, %arg7: memref<8x128xf32, #tpu.memory_space<vmem>>, %arg8: memref<64x256xf32, #tpu.memory_space<vmem>>, %arg9: memref<64x128xf32, #tpu.memory_space<vmem>>) attributes {dimension_semantics = [#tpu.dimension_semantics<arbitrary>], iteration_bounds = array<i64: 1>, scalar_prefetch = 0 : i64, scratch_operands = 3 : i64, tpu.core_type = #tpu.core_type<tc>, window_params = [{pipeline_mode = #tpu.pipeline_mode<synchronous>, transform_indices = @transform_0, window_bounds = array<i64: 128, 128>}, {pipeline_mode = #tpu.pipeline_mode<synchronous>, transform_indices = @transform_1, window_bounds = array<i64: 128, 256>}, {pipeline_mode = #tpu.pipeline_mode<synchronous>, transform_indices = @transform_2, window_bounds = array<i64: 128, 128>}, {pipeline_mode = #tpu.pipeline_mode<synchronous>, transform_indices = @transform_3, window_bounds = array<i64: 8, 128>}, {transform_indices = @transform_4, window_bounds = array<i64: 8, 8, 128>}, {transform_indices = @transform_5, window_bounds = array<i64: 8, 8, 128>}]} {
    %c0_i32 = arith.constant 0 : i32
    %0 = arith.cmpi eq, %arg0, %c0_i32 : i32
    %1 = arith.extui %0 : i1 to i32
    %c0_i32_0 = arith.constant 0 : i32
    %2 = arith.cmpi ne, %1, %c0_i32_0 : i32
    scf.if %2 {
      %c0_55 = arith.constant 0 : index
      %c0_56 = arith.constant 0 : index
      %50 = vector.load %arg4[%c0_55, %c0_56] : memref<8x128xf32, #tpu.memory_space<vmem>>, vector<8x128xf32>
      %c0_57 = arith.constant 0 : index
      %c0_58 = arith.constant 0 : index
      %51 = vector.load %arg7[%c0_57, %c0_58] : memref<8x128xf32, #tpu.memory_space<vmem>>, vector<8x128xf32>
      tpu.vector_store %arg7[%c0_57, %c0_58], %50 {strides = array<i32>} : memref<8x128xf32, #tpu.memory_space<vmem>>, vector<8x128xf32>,
    } else {
    }
    %c0 = arith.constant 0 : index
    %c0_1 = arith.constant 0 : index
    %c0_2 = arith.constant 0 : index
    %3 = vector.load %arg5[%c0, %c0_1, %c0_2] : memref<8x8x128xf32, #tpu.memory_space<vmem>>, vector<8x8x128xf32>
    %4 = vector.shape_cast %3 : vector<8x8x128xf32> to vector<64x128xf32>
    %c0_3 = arith.constant 0 : index
    %c0_4 = arith.constant 0 : index
    %5 = vector.load %arg2[%c0_3, %c0_4] : memref<128x256xf32, #tpu.memory_space<vmem>>, vector<128x256xf32>
    %cst = arith.constant dense<0.000000e+00> : vector<64x256xf32>
    %6 = tpu.matmul %4, %5, %cst {dimension_numbers = #tpu.dot_dimension_numbers<[1], [0], [0], [1], [0, 0, 1, 1], [], []>} : vector<64x128xf32>, vector<128x256xf32>, vector<64x256xf32> -> vector<64x256xf32>
    %c0_5 = arith.constant 0 : index
    %c0_6 = arith.constant 0 : index
    %7 = vector.load %arg8[%c0_5, %c0_6] : memref<64x256xf32, #tpu.memory_space<vmem>>, vector<64x256xf32>
    tpu.vector_store %arg8[%c0_5, %c0_6], %6 {strides = array<i32>} : memref<64x256xf32, #tpu.memory_space<vmem>>, vector<64x256xf32>,
    %c0_7 = arith.constant 0 : index
    %c0_8 = arith.constant 0 : index
    %8 = vector.load %arg1[%c0_7, %c0_8] : memref<128x128xf32, #tpu.memory_space<vmem>>, vector<128x128xf32>
    %c0_9 = arith.constant 0 : index
    %c0_10 = arith.constant 0 : index
    %9 = vector.load %arg7[%c0_9, %c0_10] : memref<8x128xf32, #tpu.memory_space<vmem>>, vector<8x128xf32>
    %c0_11 = arith.constant 0 : index
    %c0_12 = arith.constant 0 : index
    %10 = vector.load %arg8[%c0_11, %c0_12] : memref<64x256xf32, #tpu.memory_space<vmem>>, vector<8x128xf32>
    %cst_13 = arith.constant dense<0.000000e+00> : vector<8x128xf32>
    %11 = tpu.matmul %9, %8, %cst_13 {dimension_numbers = #tpu.dot_dimension_numbers<[1], [0], [0], [1], [0, 0, 1, 1], [], []>} : vector<8x128xf32>, vector<128x128xf32>, vector<8x128xf32> -> vector<8x128xf32>
    %12 = arith.addf %11, %10 : vector<8x128xf32>
    %c0_14 = arith.constant 0 : index
    %c0_15 = arith.constant 0 : index
    %13 = vector.load %arg9[%c0_14, %c0_15] : memref<64x128xf32, #tpu.memory_space<vmem>>, vector<8x128xf32>
    tpu.vector_store %arg9[%c0_14, %c0_15], %12 {strides = array<i32>} : memref<64x128xf32, #tpu.memory_space<vmem>>, vector<8x128xf32>,
    %c8 = arith.constant 8 : index
    %c0_16 = arith.constant 0 : index
    %14 = vector.load %arg8[%c8, %c0_16] : memref<64x256xf32, #tpu.memory_space<vmem>>, vector<8x128xf32>
    %cst_17 = arith.constant dense<0.000000e+00> : vector<8x128xf32>
    %15 = tpu.matmul %12, %8, %cst_17 {dimension_numbers = #tpu.dot_dimension_numbers<[1], [0], [0], [1], [0, 0, 1, 1], [], []>} : vector<8x128xf32>, vector<128x128xf32>, vector<8x128xf32> -> vector<8x128xf32>
    %16 = arith.addf %15, %14 : vector<8x128xf32>
    %c8_18 = arith.constant 8 : index
    %c0_19 = arith.constant 0 : index
    %17 = vector.load %arg9[%c8_18, %c0_19] : memref<64x128xf32, #tpu.memory_space<vmem>>, vector<8x128xf32>
    tpu.vector_store %arg9[%c8_18, %c0_19], %16 {strides = array<i32>} : memref<64x128xf32, #tpu.memory_space<vmem>>, vector<8x128xf32>,
    %c16 = arith.constant 16 : index
    %c0_20 = arith.constant 0 : index
    %18 = vector.load %arg8[%c16, %c0_20] : memref<64x256xf32, #tpu.memory_space<vmem>>, vector<8x128xf32>
    %cst_21 = arith.constant dense<0.000000e+00> : vector<8x128xf32>
    %19 = tpu.matmul %16, %8, %cst_21 {dimension_numbers = #tpu.dot_dimension_numbers<[1], [0], [0], [1], [0, 0, 1, 1], [], []>} : vector<8x128xf32>, vector<128x128xf32>, vector<8x128xf32> -> vector<8x128xf32>
    %20 = arith.addf %19, %18 : vector<8x128xf32>
    %c16_22 = arith.constant 16 : index
    %c0_23 = arith.constant 0 : index
    %21 = vector.load %arg9[%c16_22, %c0_23] : memref<64x128xf32, #tpu.memory_space<vmem>>, vector<8x128xf32>
    tpu.vector_store %arg9[%c16_22, %c0_23], %20 {strides = array<i32>} : memref<64x128xf32, #tpu.memory_space<vmem>>, vector<8x128xf32>,
    %c24 = arith.constant 24 : index
    %c0_24 = arith.constant 0 : index
    %22 = vector.load %arg8[%c24, %c0_24] : memref<64x256xf32, #tpu.memory_space<vmem>>, vector<8x128xf32>
    %cst_25 = arith.constant dense<0.000000e+00> : vector<8x128xf32>
    %23 = tpu.matmul %20, %8, %cst_25 {dimension_numbers = #tpu.dot_dimension_numbers<[1], [0], [0], [1], [0, 0, 1, 1], [], []>} : vector<8x128xf32>, vector<128x128xf32>, vector<8x128xf32> -> vector<8x128xf32>
    %24 = arith.addf %23, %22 : vector<8x128xf32>
    %c24_26 = arith.constant 24 : index
    %c0_27 = arith.constant 0 : index
    %25 = vector.load %arg9[%c24_26, %c0_27] : memref<64x128xf32, #tpu.memory_space<vmem>>, vector<8x128xf32>
    tpu.vector_store %arg9[%c24_26, %c0_27], %24 {strides = array<i32>} : memref<64x128xf32, #tpu.memory_space<vmem>>, vector<8x128xf32>,
    %c32 = arith.constant 32 : index
    %c0_28 = arith.constant 0 : index
    %26 = vector.load %arg8[%c32, %c0_28] : memref<64x256xf32, #tpu.memory_space<vmem>>, vector<8x128xf32>
    %cst_29 = arith.constant dense<0.000000e+00> : vector<8x128xf32>
    %27 = tpu.matmul %24, %8, %cst_29 {dimension_numbers = #tpu.dot_dimension_numbers<[1], [0], [0], [1], [0, 0, 1, 1], [], []>} : vector<8x128xf32>, vector<128x128xf32>, vector<8x128xf32> -> vector<8x128xf32>
    %28 = arith.addf %27, %26 : vector<8x128xf32>
    %c32_30 = arith.constant 32 : index
    %c0_31 = arith.constant 0 : index
    %29 = vector.load %arg9[%c32_30, %c0_31] : memref<64x128xf32, #tpu.memory_space<vmem>>, vector<8x128xf32>
    tpu.vector_store %arg9[%c32_30, %c0_31], %28 {strides = array<i32>} : memref<64x128xf32, #tpu.memory_space<vmem>>, vector<8x128xf32>,
    %c40 = arith.constant 40 : index
    %c0_32 = arith.constant 0 : index
    %30 = vector.load %arg8[%c40, %c0_32] : memref<64x256xf32, #tpu.memory_space<vmem>>, vector<8x128xf32>
    %cst_33 = arith.constant dense<0.000000e+00> : vector<8x128xf32>
    %31 = tpu.matmul %28, %8, %cst_33 {dimension_numbers = #tpu.dot_dimension_numbers<[1], [0], [0], [1], [0, 0, 1, 1], [], []>} : vector<8x128xf32>, vector<128x128xf32>, vector<8x128xf32> -> vector<8x128xf32>
    %32 = arith.addf %31, %30 : vector<8x128xf32>
    %c40_34 = arith.constant 40 : index
    %c0_35 = arith.constant 0 : index
    %33 = vector.load %arg9[%c40_34, %c0_35] : memref<64x128xf32, #tpu.memory_space<vmem>>, vector<8x128xf32>
    tpu.vector_store %arg9[%c40_34, %c0_35], %32 {strides = array<i32>} : memref<64x128xf32, #tpu.memory_space<vmem>>, vector<8x128xf32>,
    %c48 = arith.constant 48 : index
    %c0_36 = arith.constant 0 : index
    %34 = vector.load %arg8[%c48, %c0_36] : memref<64x256xf32, #tpu.memory_space<vmem>>, vector<8x128xf32>
    %cst_37 = arith.constant dense<0.000000e+00> : vector<8x128xf32>
    %35 = tpu.matmul %32, %8, %cst_37 {dimension_numbers = #tpu.dot_dimension_numbers<[1], [0], [0], [1], [0, 0, 1, 1], [], []>} : vector<8x128xf32>, vector<128x128xf32>, vector<8x128xf32> -> vector<8x128xf32>
    %36 = arith.addf %35, %34 : vector<8x128xf32>
    %c48_38 = arith.constant 48 : index
    %c0_39 = arith.constant 0 : index
    %37 = vector.load %arg9[%c48_38, %c0_39] : memref<64x128xf32, #tpu.memory_space<vmem>>, vector<8x128xf32>
    tpu.vector_store %arg9[%c48_38, %c0_39], %36 {strides = array<i32>} : memref<64x128xf32, #tpu.memory_space<vmem>>, vector<8x128xf32>,
    %c56 = arith.constant 56 : index
    %c0_40 = arith.constant 0 : index
    %38 = vector.load %arg8[%c56, %c0_40] : memref<64x256xf32, #tpu.memory_space<vmem>>, vector<8x128xf32>
    %cst_41 = arith.constant dense<0.000000e+00> : vector<8x128xf32>
    %39 = tpu.matmul %36, %8, %cst_41 {dimension_numbers = #tpu.dot_dimension_numbers<[1], [0], [0], [1], [0, 0, 1, 1], [], []>} : vector<8x128xf32>, vector<128x128xf32>, vector<8x128xf32> -> vector<8x128xf32>
    %40 = arith.addf %39, %38 : vector<8x128xf32>
    %c56_42 = arith.constant 56 : index
    %c0_43 = arith.constant 0 : index
    %41 = vector.load %arg9[%c56_42, %c0_43] : memref<64x128xf32, #tpu.memory_space<vmem>>, vector<8x128xf32>
    tpu.vector_store %arg9[%c56_42, %c0_43], %40 {strides = array<i32>} : memref<64x128xf32, #tpu.memory_space<vmem>>, vector<8x128xf32>,
    %c0_44 = arith.constant 0 : index
    %c0_45 = arith.constant 0 : index
    %42 = vector.load %arg7[%c0_44, %c0_45] : memref<8x128xf32, #tpu.memory_space<vmem>>, vector<8x128xf32>
    tpu.vector_store %arg7[%c0_44, %c0_45], %40 {strides = array<i32>} : memref<8x128xf32, #tpu.memory_space<vmem>>, vector<8x128xf32>,
    %c0_46 = arith.constant 0 : index
    %c0_47 = arith.constant 0 : index
    %43 = vector.load %arg9[%c0_46, %c0_47] : memref<64x128xf32, #tpu.memory_space<vmem>>, vector<64x128xf32>
    %c0_48 = arith.constant 0 : index
    %c0_49 = arith.constant 0 : index
    %44 = vector.load %arg3[%c0_48, %c0_49] : memref<128x128xf32, #tpu.memory_space<vmem>>, vector<128x128xf32>
    %cst_50 = arith.constant dense<0.000000e+00> : vector<64x128xf32>
    %45 = tpu.matmul %43, %44, %cst_50 {dimension_numbers = #tpu.dot_dimension_numbers<[1], [0], [0], [1], [0, 0, 1, 1], [], []>} : vector<64x128xf32>, vector<128x128xf32>, vector<64x128xf32> -> vector<64x128xf32>
    %c0_51 = arith.constant 0 : index
    %c128 = arith.constant 128 : index
    %46 = vector.load %arg8[%c0_51, %c128] : memref<64x256xf32, #tpu.memory_space<vmem>>, vector<64x128xf32>
    %47 = arith.addf %45, %46 : vector<64x128xf32>
    %48 = vector.shape_cast %47 : vector<64x128xf32> to vector<8x8x128xf32>
    %c0_52 = arith.constant 0 : index
    %c0_53 = arith.constant 0 : index
    %c0_54 = arith.constant 0 : index
    %49 = vector.load %arg6[%c0_52, %c0_53, %c0_54] : memref<8x8x128xf32, #tpu.memory_space<vmem>>, vector<8x8x128xf32>
    tpu.vector_store %arg6[%c0_52, %c0_53, %c0_54], %48 {strides = array<i32>} : memref<8x8x128xf32, #tpu.memory_space<vmem>>, vector<8x8x128xf32>,
    return
  }
  func.func @transform_0(%arg0: i32) -> (i32, i32) {
    %c0_i32 = arith.constant 0 : i32
    %c0_i32_0 = arith.constant 0 : i32
    %c0_i32_1 = arith.constant 0 : i32
    return %c0_i32, %c0_i32_0 : i32, i32
  }
  func.func @transform_1(%arg0: i32) -> (i32, i32) {
    %c0_i32 = arith.constant 0 : i32
    %c0_i32_0 = arith.constant 0 : i32
    %c0_i32_1 = arith.constant 0 : i32
    return %c0_i32, %c0_i32_0 : i32, i32
  }
  func.func @transform_2(%arg0: i32) -> (i32, i32) {
    %c0_i32 = arith.constant 0 : i32
    %c0_i32_0 = arith.constant 0 : i32
    %c0_i32_1 = arith.constant 0 : i32
    return %c0_i32, %c0_i32_0 : i32, i32
  }
  func.func @transform_3(%arg0: i32) -> (i32, i32) {
    %c0_i32 = arith.constant 0 : i32
    %c0_i32_0 = arith.constant 0 : i32
    %c0_i32_1 = arith.constant 0 : i32
    return %c0_i32, %c0_i32_0 : i32, i32
  }
  func.func @transform_4(%arg0: i32) -> (i32, i32, i32) {
    %c0_i32 = arith.constant 0 : i32
    %c0_i32_0 = arith.constant 0 : i32
    %c0_i32_1 = arith.constant 0 : i32
    return %arg0, %c0_i32, %c0_i32_0 : i32, i32, i32
  }
  func.func @transform_5(%arg0: i32) -> (i32, i32, i32) {
    %c0_i32 = arith.constant 0 : i32
    %c0_i32_0 = arith.constant 0 : i32
    %c0_i32_1 = arith.constant 0 : i32
    return %arg0, %c0_i32, %c0_i32_0 : i32, i32, i32
  }
}

</mosaic_0001>

<llo_original>
// kernel: tpu_custom_call.1
$region0: #{tpu_custom_call.1}
  #allocation0 [shape = 'u32[]', space=smem, size = 0x4, offset = 0x4, fixed_abs, tag = 'smem constant byte address 0x4 - core index']
  #allocation1 [shape = 'u32[144,128]{1,0:T(1,128)}', space=vmem, size = 0x12000, scoped, tag = 'internal scratch']
  #allocation2 [shape = 'f32[8,128]{1,0:T(8,128)}', space=vmem, size = 0x1000, scoped, tag = 'scratch operand']
  #allocation3 [shape = 'f32[64,256]{1,0:T(8,128)}', space=vmem, size = 0x10000, scoped, tag = 'scratch operand']
  #allocation4 [shape = 'f32[64,128]{1,0:T(8,128)}', space=vmem, size = 0x8000, scoped, tag = 'scratch operand']
  %s0 = inlined_call_operand.hbm [shape: f32[128,128], index: 0, kind: input, shape index: {}]
  %s1 = inlined_call_operand.hbm [shape: f32[128,256], index: 1, kind: input, shape index: {}]
  %s2 = inlined_call_operand.hbm [shape: f32[128,128], index: 2, kind: input, shape index: {}]
  %s3 = inlined_call_operand.vmem [shape: f32[8,128], index: 3, kind: input, shape index: {}]
  %s4 = inlined_call_operand.hbm [shape: f32[8,8,128], index: 4, kind: input, shape index: {}]
  %s5 = inlined_call_operand.hbm [shape: f32[8,8,128], index: 5, kind: output, shape index: {}]
  %s6 = sld [smem:[#allocation0]]
  $region50: #{tpu_custom_call.1} parent=0
    _
  %s8 = ssub.s32 1, %s6
  %s9 = scalar_select 0, %s8, %s6
  $region1: #{tpu_custom_call.1} parent=0
    #allocation5 [shape = 'u8[65536]{0}', space=vmem, size = 0x10000, scoped, tag = 'input window, operand 0, single buffered']
    #allocation6 [shape = 's32[1]{0}', space=sflag, size = 0x4, scoped, tag = 'scoped memory for tpu_custom_call.1']
    #allocation7 [shape = 's32[1]{0}', space=sflag, size = 0x4, scoped, tag = 'scoped memory for tpu_custom_call.1']
    #allocation8 [shape = 'u8[131072]{0}', space=vmem, size = 0x20000, scoped, tag = 'input window, operand 1, single buffered']
    #allocation9 [shape = 's32[1]{0}', space=sflag, size = 0x4, scoped, tag = 'scoped memory for tpu_custom_call.1']
    #allocation10 [shape = 'u8[65536]{0}', space=vmem, size = 0x10000, scoped, tag = 'input window, operand 2, single buffered']
    #allocation11 [shape = 'u8[32768]{0}', space=vmem, size = 0x8000, scoped, tag = 'input window, operand 4, single buffered']
    #allocation12 [shape = 's32[1]{0}', space=sflag, size = 0x4, scoped, tag = 'scoped memory for tpu_custom_call.1']
    #allocation13 [shape = 'u8[32768]{0}', space=vmem, size = 0x8000, scoped, tag = 'output window, operand 0, single buffered']
    %10 = vsyncpa [#allocation6], 0
    %11 = vsyncpa [#allocation9], 0
    %12 = vsyncpa [#allocation12], 0
    %13 = vsyncpa [#allocation7], 0
    // Predicated region
    $region2: #{tpu_custom_call.1} parent=1 // pred_check
      _
    $region3: #{tpu_custom_call.1} parent=1 // pred_check_branch
      %15 = sbr.rel (0) target = $region5
    $region4: #{tpu_custom_call.1} parent=1 // pred_region
      %s17 = ssub.s32 2048, 2048
      %18 = vsyncadd [#allocation6], %s17
      %s19 = sshll.u32 [#allocation5], 4
      %s20 = int_to_ptr.vmem [resolvable:$true] %s19
      %25 = dma.hbm_to_vmem [thread:$0]  %s0, 2048, %s20, [#allocation6], 128, 128, 8
    $region5: #{tpu_custom_call.1} parent=1 // pred_fallthru
      _
    // Predicated region
    $region6: #{tpu_custom_call.1} parent=1 // pred_check
      _
    $region7: #{tpu_custom_call.1} parent=1 // pred_check_branch
      %27 = sbr.rel (0) target = $region9
    $region8: #{tpu_custom_call.1} parent=1 // pred_region
      %s29 = ssub.s32 4096, 4096
      %30 = vsyncadd [#allocation9], %s29
      %s31 = sshll.u32 [#allocation8], 4
      %s32 = int_to_ptr.vmem [resolvable:$true] %s31
      %37 = dma.hbm_to_vmem [thread:$0]  %s1, 4096, %s32, [#allocation9], 256, 256, 16
    $region9: #{tpu_custom_call.1} parent=1 // pred_fallthru
      _
    // Predicated region
    $region10: #{tpu_custom_call.1} parent=1 // pred_check
      _
    $region11: #{tpu_custom_call.1} parent=1 // pred_check_branch
      %39 = sbr.rel (0) target = $region13
    $region12: #{tpu_custom_call.1} parent=1 // pred_region
      %s41 = ssub.s32 2048, 2048
      %42 = vsyncadd [#allocation9], %s41
      %s43 = sshll.u32 [#allocation10], 4
      %s44 = int_to_ptr.vmem [resolvable:$true] %s43
      %49 = dma.hbm_to_vmem [thread:$0]  %s2, 2048, %s44, [#allocation9], 128, 128, 8
    $region13: #{tpu_custom_call.1} parent=1 // pred_fallthru
      _
    // Predicated region
    $region14: #{tpu_custom_call.1} parent=1 // pred_check
      _
    $region15: #{tpu_custom_call.1} parent=1 // pred_check_branch
      %51 = sbr.rel (0) target = $region17
    $region16: #{tpu_custom_call.1} parent=1 // pred_region
      _
    $region17: #{tpu_custom_call.1} parent=1 // pred_fallthru
      _
    // Predicated region
    $region18: #{tpu_custom_call.1} parent=1 // pred_check
      _
    $region19: #{tpu_custom_call.1} parent=1 // pred_check_branch
      %53 = sbr.rel (0) target = $region21
    $region20: #{tpu_custom_call.1} parent=1 // pred_region
      %s55 = ssub.s32 1024, 1024
      %56 = vsyncadd [#allocation12], %s55
      %s57 = sshll.u32 [#allocation11], 4
      %s58 = int_to_ptr.vmem [resolvable:$true] %s57
      %63 = dma.hbm_to_vmem [thread:$0]  %s4, 1024, %s58, [#allocation12], 128, 128, 8
    $region21: #{tpu_custom_call.1} parent=1 // pred_fallthru
      _
    // Predicated region
    $region22: #{tpu_custom_call.1} parent=1 // pred_check
      _
    $region23: #{tpu_custom_call.1} parent=1 // pred_check_branch
      %65 = sbr.rel (0) target = $region25
    $region24: #{tpu_custom_call.1} parent=1 // pred_region
      %66 = dma.done [#allocation6], 2048
    $region25: #{tpu_custom_call.1} parent=1 // pred_fallthru
      _
    // Predicated region
    $region26: #{tpu_custom_call.1} parent=1 // pred_check
      _
    $region27: #{tpu_custom_call.1} parent=1 // pred_check_branch
      %68 = sbr.rel (0) target = $region29
    $region28: #{tpu_custom_call.1} parent=1 // pred_region
      %69 = dma.done [#allocation9], 4096
    $region29: #{tpu_custom_call.1} parent=1 // pred_fallthru
      _
    // Predicated region
    $region30: #{tpu_custom_call.1} parent=1 // pred_check
      _
    $region31: #{tpu_custom_call.1} parent=1 // pred_check_branch
      %71 = sbr.rel (0) target = $region33
    $region32: #{tpu_custom_call.1} parent=1 // pred_region
      %72 = dma.done [#allocation9], 2048
    $region33: #{tpu_custom_call.1} parent=1 // pred_fallthru
      _
    // Predicated region
    $region34: #{tpu_custom_call.1} parent=1 // pred_check
      _
    $region35: #{tpu_custom_call.1} parent=1 // pred_check_branch
      %74 = sbr.rel (0) target = $region37
    $region36: #{tpu_custom_call.1} parent=1 // pred_region
      %75 = dma.done [#allocation12], 1024
    $region37: #{tpu_custom_call.1} parent=1 // pred_fallthru
      _
    %p76 = scmp.eq.s32.totalorder 0, 0
    // Predicated region
    $region38: #{tpu_custom_call.1} parent=1 // pred_check
      %p77 = pneg %p76
    $region39: #{tpu_custom_call.1} parent=1 // pred_check_branch
      %79 = sbr.rel (%p77) target = $region41
    $region40: #{tpu_custom_call.1} parent=1 // pred_region
      %v80 = vld [vmem:[%s3] sm:$0xff]
      %81 = vst [vmem:[#allocation2] sm:$0xff] %v80
    $region41: #{tpu_custom_call.1} parent=1 // pred_fallthru
      _
    %v82 = vld [vmem:[#allocation11] sm:$0xff]
    %v83 = vld [vmem:[#allocation11 + $0x8] sm:$0xff]
    %v84 = vld [vmem:[#allocation11 + $0x10] sm:$0xff]
    %v85 = vld [vmem:[#allocation11 + $0x18] sm:$0xff]
    %v86 = vld [vmem:[#allocation11 + $0x20] sm:$0xff]
    %v87 = vld [vmem:[#allocation11 + $0x28] sm:$0xff]
    %v88 = vld [vmem:[#allocation11 + $0x30] sm:$0xff]
    %v89 = vld [vmem:[#allocation11 + $0x38] sm:$0xff]
    %v90 = vld [vmem:[#allocation8] sm:$0xff]
    %v91 = vld [vmem:[#allocation8 + $0x8] sm:$0xff]
    %v92 = vld [vmem:[#allocation8 + $0x10] sm:$0xff]
    %v93 = vld [vmem:[#allocation8 + $0x18] sm:$0xff]
    %v94 = vld [vmem:[#allocation8 + $0x20] sm:$0xff]
    %v95 = vld [vmem:[#allocation8 + $0x28] sm:$0xff]
    %v96 = vld [vmem:[#allocation8 + $0x30] sm:$0xff]
    %v97 = vld [vmem:[#allocation8 + $0x38] sm:$0xff]
    %v98 = vld [vmem:[#allocation8 + $0x40] sm:$0xff]
    %v99 = vld [vmem:[#allocation8 + $0x48] sm:$0xff]
    %v100 = vld [vmem:[#allocation8 + $0x50] sm:$0xff]
    %v101 = vld [vmem:[#allocation8 + $0x58] sm:$0xff]
    %v102 = vld [vmem:[#allocation8 + $0x60] sm:$0xff]
    %v103 = vld [vmem:[#allocation8 + $0x68] sm:$0xff]
    %v104 = vld [vmem:[#allocation8 + $0x70] sm:$0xff]
    %v105 = vld [vmem:[#allocation8 + $0x78] sm:$0xff]
    %v106 = vld [vmem:[#allocation8 + $0x80] sm:$0xff]
    %v107 = vld [vmem:[#allocation8 + $0x88] sm:$0xff]
    %v108 = vld [vmem:[#allocation8 + $0x90] sm:$0xff]
    %v109 = vld [vmem:[#allocation8 + $0x98] sm:$0xff]
    %v110 = vld [vmem:[#allocation8 + $0xa0] sm:$0xff]
    %v111 = vld [vmem:[#allocation8 + $0xa8] sm:$0xff]
    %v112 = vld [vmem:[#allocation8 + $0xb0] sm:$0xff]
    %v113 = vld [vmem:[#allocation8 + $0xb8] sm:$0xff]
    %v114 = vld [vmem:[#allocation8 + $0xc0] sm:$0xff]
    %v115 = vld [vmem:[#allocation8 + $0xc8] sm:$0xff]
    %v116 = vld [vmem:[#allocation8 + $0xd0] sm:$0xff]
    %v117 = vld [vmem:[#allocation8 + $0xd8] sm:$0xff]
    %v118 = vld [vmem:[#allocation8 + $0xe0] sm:$0xff]
    %v119 = vld [vmem:[#allocation8 + $0xe8] sm:$0xff]
    %v120 = vld [vmem:[#allocation8 + $0xf0] sm:$0xff]
    %v121 = vld [vmem:[#allocation8 + $0xf8] sm:$0xff]
    %122 = vmatprep.subr.mxu0 %v91
    %123 = vmatpush1.msra.mxu0 %v90
    %124 = vmatprep.subr.mxu0 %v93
    %125 = vmatpush1.msra.mxu0 %v92
    %126 = vmatprep.subr.mxu0 %v95
    %127 = vmatpush1.msra.mxu0 %v94
    %128 = vmatprep.subr.mxu0 %v97
    %129 = vmatpush1.msra.mxu0 %v96
    %130 = vmatprep.subr.mxu0 %v99
    %131 = vmatpush1.msra.mxu0 %v98
    %132 = vmatprep.subr.mxu0 %v101
    %133 = vmatpush1.msra.mxu0 %v100
    %134 = vmatprep.subr.mxu0 %v103
    %135 = vmatpush1.msra.mxu0 %v102
    %136 = vmatprep.subr.mxu0 %v105
    %137 = vmatpush1.msra.mxu0 %v104
    %138 = vmatprep.subr.mxu0 %v107
    %139 = vmatpush1.msra.mxu0 %v106
    %140 = vmatprep.subr.mxu0 %v109
    %141 = vmatpush1.msra.mxu0 %v108
    %142 = vmatprep.subr.mxu0 %v111
    %143 = vmatpush1.msra.mxu0 %v110
    %144 = vmatprep.subr.mxu0 %v113
    %145 = vmatpush1.msra.mxu0 %v112
    %146 = vmatprep.subr.mxu0 %v115
    %147 = vmatpush1.msra.mxu0 %v114
    %148 = vmatprep.subr.mxu0 %v117
    %149 = vmatpush1.msra.mxu0 %v116
    %150 = vmatprep.subr.mxu0 %v119
    %151 = vmatpush1.msra.mxu0 %v118
    %152 = vmatprep.subr.mxu0 %v121
    %153 = vmatpush1.msra.mxu0 %v120
    %154 = vmatprep.subr.mxu0 0.0
    %155 = vmatpush1.msra.mxu0 0.0
    %156 = vmatprep.subr.mxu0 0.0
    %157 = vmatpush1.msra.mxu0 0.0
    %158 = vmatprep.subr.mxu0 0.0
    %159 = vmatpush1.msra.mxu0 0.0
    %160 = vmatprep.subr.mxu0 0.0
    %161 = vmatpush1.msra.mxu0 0.0
    %162 = vmatprep.subr.mxu0 0.0
    %163 = vmatpush1.msra.mxu0 0.0
    %164 = vmatprep.subr.mxu0 0.0
    %165 = vmatpush1.msra.mxu0 0.0
    %166 = vmatprep.subr.mxu0 0.0
    %167 = vmatpush1.msra.mxu0 0.0
    %168 = vmatprep.subr.mxu0 0.0
    %169 = vmatpush1.msra.mxu0 0.0
    %170 = vmatprep.subr.mxu0 0.0
    %171 = vmatpush1.msra.mxu0 0.0
    %172 = vmatprep.subr.mxu0 0.0
    %173 = vmatpush1.msra.mxu0 0.0
    %174 = vmatprep.subr.mxu0 0.0
    %175 = vmatpush1.msra.mxu0 0.0
    %176 = vmatprep.subr.mxu0 0.0
    %177 = vmatpush1.msra.mxu0 0.0
    %178 = vmatprep.subr.mxu0 0.0
    %179 = vmatpush1.msra.mxu0 0.0
    %180 = vmatprep.subr.mxu0 0.0
    %181 = vmatpush1.msra.mxu0 0.0
    %182 = vmatprep.subr.mxu0 0.0
    %183 = vmatpush1.msra.mxu0 0.0
    %184 = vmatprep.subr.mxu0 0.0
    %185 = vmatpush1.msra.mxu0 0.0
    %186 = vmatprep.mubr.f32.mxu0 0.0
    %187 = vmatmul.mubr.f32.gmra.mrb[0].mxu0 %v82
    %v188 = vpop.f32.mrb[0].mxu0
    %v189 = vadd.f32 0.0, %v188
    %v190 = vpop.f32.mrb[0].mxu0
    %v191 = vadd.f32 0.0, %v190
    %192 = vmatprep.mubr.f32.mxu0 0.0
    %193 = vmatmul.mubr.f32.gmra.mrb[0].mxu0 %v83
    %v194 = vpop.f32.mrb[0].mxu0
    %v195 = vadd.f32 0.0, %v194
    %v196 = vpop.f32.mrb[0].mxu0
    %v197 = vadd.f32 0.0, %v196
    %198 = vmatprep.mubr.f32.mxu0 0.0
    %199 = vmatmul.mubr.f32.gmra.mrb[0].mxu0 %v84
    %v200 = vpop.f32.mrb[0].mxu0
    %v201 = vadd.f32 0.0, %v200
    %v202 = vpop.f32.mrb[0].mxu0
    %v203 = vadd.f32 0.0, %v202
    %204 = vmatprep.mubr.f32.mxu0 0.0
    %205 = vmatmul.mubr.f32.gmra.mrb[0].mxu0 %v85
    %v206 = vpop.f32.mrb[0].mxu0
    %v207 = vadd.f32 0.0, %v206
    %v208 = vpop.f32.mrb[0].mxu0
    %v209 = vadd.f32 0.0, %v208
    %210 = vmatprep.mubr.f32.mxu0 0.0
    %211 = vmatmul.mubr.f32.gmra.mrb[0].mxu0 %v86
    %v212 = vpop.f32.mrb[0].mxu0
    %v213 = vadd.f32 0.0, %v212
    %v214 = vpop.f32.mrb[0].mxu0
    %v215 = vadd.f32 0.0, %v214
    %216 = vmatprep.mubr.f32.mxu0 0.0
    %217 = vmatmul.mubr.f32.gmra.mrb[0].mxu0 %v87
    %v218 = vpop.f32.mrb[0].mxu0
    %v219 = vadd.f32 0.0, %v218
    %v220 = vpop.f32.mrb[0].mxu0
    %v221 = vadd.f32 0.0, %v220
    %222 = vmatprep.mubr.f32.mxu0 0.0
    %223 = vmatmul.mubr.f32.gmra.mrb[0].mxu0 %v88
    %v224 = vpop.f32.mrb[0].mxu0
    %v225 = vadd.f32 0.0, %v224
    %v226 = vpop.f32.mrb[0].mxu0
    %v227 = vadd.f32 0.0, %v226
    %228 = vmatprep.mubr.f32.mxu0 0.0
    %229 = vmatmul.mubr.f32.gmra.mrb[0].mxu0 %v89
    %v230 = vpop.f32.mrb[0].mxu0
    %v231 = vadd.f32 0.0, %v230
    %v232 = vpop.f32.mrb[0].mxu0
    %v233 = vadd.f32 0.0, %v232
    %234 = vdwg.mxu0
    %235 = vst [vmem:[#allocation3] sm:$0xff] %v189
    %236 = vst [vmem:[#allocation3 + $0x8] sm:$0xff] %v191
    %237 = vst [vmem:[#allocation3 + $0x10] sm:$0xff] %v195
    %238 = vst [vmem:[#allocation3 + $0x18] sm:$0xff] %v197
    %239 = vst [vmem:[#allocation3 + $0x20] sm:$0xff] %v201
    %240 = vst [vmem:[#allocation3 + $0x28] sm:$0xff] %v203
    %241 = vst [vmem:[#allocation3 + $0x30] sm:$0xff] %v207
    %242 = vst [vmem:[#allocation3 + $0x38] sm:$0xff] %v209
    %243 = vst [vmem:[#allocation3 + $0x40] sm:$0xff] %v213
    %244 = vst [vmem:[#allocation3 + $0x48] sm:$0xff] %v215
    %245 = vst [vmem:[#allocation3 + $0x50] sm:$0xff] %v219
    %246 = vst [vmem:[#allocation3 + $0x58] sm:$0xff] %v221
    %247 = vst [vmem:[#allocation3 + $0x60] sm:$0xff] %v225
    %248 = vst [vmem:[#allocation3 + $0x68] sm:$0xff] %v227
    %249 = vst [vmem:[#allocation3 + $0x70] sm:$0xff] %v231
    %250 = vst [vmem:[#allocation3 + $0x78] sm:$0xff] %v233
    %v251 = vld [vmem:[#allocation5] sm:$0xff]
    %v252 = vld [vmem:[#allocation5 + $0x8] sm:$0xff]
    %v253 = vld [vmem:[#allocation5 + $0x10] sm:$0xff]
    %v254 = vld [vmem:[#allocation5 + $0x18] sm:$0xff]
    %v255 = vld [vmem:[#allocation5 + $0x20] sm:$0xff]
    %v256 = vld [vmem:[#allocation5 + $0x28] sm:$0xff]
    %v257 = vld [vmem:[#allocation5 + $0x30] sm:$0xff]
    %v258 = vld [vmem:[#allocation5 + $0x38] sm:$0xff]
    %v259 = vld [vmem:[#allocation5 + $0x40] sm:$0xff]
    %v260 = vld [vmem:[#allocation5 + $0x48] sm:$0xff]
    %v261 = vld [vmem:[#allocation5 + $0x50] sm:$0xff]
    %v262 = vld [vmem:[#allocation5 + $0x58] sm:$0xff]
    %v263 = vld [vmem:[#allocation5 + $0x60] sm:$0xff]
    %v264 = vld [vmem:[#allocation5 + $0x68] sm:$0xff]
    %v265 = vld [vmem:[#allocation5 + $0x70] sm:$0xff]
    %v266 = vld [vmem:[#allocation5 + $0x78] sm:$0xff]
    %v267 = vld [vmem:[#allocation2] sm:$0xff]
    %v268 = vld [vmem:[#allocation3] sm:$0xff]
    %269 = vmatprep.subr.mxu0 0.0
    %270 = vmatpush1.msra.mxu0 %v251
    %271 = vmatprep.subr.mxu0 0.0
    %272 = vmatpush1.msra.mxu0 %v252
    %273 = vmatprep.subr.mxu0 0.0
    %274 = vmatpush1.msra.mxu0 %v253
    %275 = vmatprep.subr.mxu0 0.0
    %276 = vmatpush1.msra.mxu0 %v254
    %277 = vmatprep.subr.mxu0 0.0
    %278 = vmatpush1.msra.mxu0 %v255
    %279 = vmatprep.subr.mxu0 0.0
    %280 = vmatpush1.msra.mxu0 %v256
    %281 = vmatprep.subr.mxu0 0.0
    %282 = vmatpush1.msra.mxu0 %v257
    %283 = vmatprep.subr.mxu0 0.0
    %284 = vmatpush1.msra.mxu0 %v258
    %285 = vmatprep.subr.mxu0 0.0
    %286 = vmatpush1.msra.mxu0 %v259
    %287 = vmatprep.subr.mxu0 0.0
    %288 = vmatpush1.msra.mxu0 %v260
    %289 = vmatprep.subr.mxu0 0.0
    %290 = vmatpush1.msra.mxu0 %v261
    %291 = vmatprep.subr.mxu0 0.0
    %292 = vmatpush1.msra.mxu0 %v262
    %293 = vmatprep.subr.mxu0 0.0
    %294 = vmatpush1.msra.mxu0 %v263
    %295 = vmatprep.subr.mxu0 0.0
    %296 = vmatpush1.msra.mxu0 %v264
    %297 = vmatprep.subr.mxu0 0.0
    %298 = vmatpush1.msra.mxu0 %v265
    %299 = vmatprep.subr.mxu0 0.0
    %300 = vmatpush1.msra.mxu0 %v266
    %301 = vmatprep.subr.mxu0 0.0
    %302 = vmatpush1.msra.mxu0 0.0
    %303 = vmatprep.subr.mxu0 0.0
    %304 = vmatpush1.msra.mxu0 0.0
    %305 = vmatprep.subr.mxu0 0.0
    %306 = vmatpush1.msra.mxu0 0.0
    %307 = vmatprep.subr.mxu0 0.0
    %308 = vmatpush1.msra.mxu0 0.0
    %309 = vmatprep.subr.mxu0 0.0
    %310 = vmatpush1.msra.mxu0 0.0
    %311 = vmatprep.subr.mxu0 0.0
    %312 = vmatpush1.msra.mxu0 0.0
    %313 = vmatprep.subr.mxu0 0.0
    %314 = vmatpush1.msra.mxu0 0.0
    %315 = vmatprep.subr.mxu0 0.0
    %316 = vmatpush1.msra.mxu0 0.0
    %317 = vmatprep.subr.mxu0 0.0
    %318 = vmatpush1.msra.mxu0 0.0
    %319 = vmatprep.subr.mxu0 0.0
    %320 = vmatpush1.msra.mxu0 0.0
    %321 = vmatprep.subr.mxu0 0.0
    %322 = vmatpush1.msra.mxu0 0.0
    %323 = vmatprep.subr.mxu0 0.0
    %324 = vmatpush1.msra.mxu0 0.0
    %325 = vmatprep.subr.mxu0 0.0
    %326 = vmatpush1.msra.mxu0 0.0
    %327 = vmatprep.subr.mxu0 0.0
    %328 = vmatpush1.msra.mxu0 0.0
    %329 = vmatprep.subr.mxu0 0.0
    %330 = vmatpush1.msra.mxu0 0.0
    %331 = vmatprep.subr.mxu0 0.0
    %332 = vmatpush1.msra.mxu0 0.0
    %333 = vmatprep.mubr.f32.mxu0 0.0
    %334 = vmatmul.mubr.f32.gmra.mrb[0].mxu0 %v267
    %v335 = vpop.f32.mrb[0].mxu0
    %v336 = vadd.f32 %v268, %v335
    %v337 = vpop.f32.mrb[0].mxu0
    %338 = vdwg.mxu0
    %339 = vst [vmem:[#allocation4] sm:$0xff] %v336
    %v340 = vld [vmem:[#allocation3 + $0x10] sm:$0xff]
    %341 = vmatprep.subr.mxu0 0.0
    %342 = vmatpush1.msra.mxu0 %v251
    %343 = vmatprep.subr.mxu0 0.0
    %344 = vmatpush1.msra.mxu0 %v252
    %345 = vmatprep.subr.mxu0 0.0
    %346 = vmatpush1.msra.mxu0 %v253
    %347 = vmatprep.subr.mxu0 0.0
    %348 = vmatpush1.msra.mxu0 %v254
    %349 = vmatprep.subr.mxu0 0.0
    %350 = vmatpush1.msra.mxu0 %v255
    %351 = vmatprep.subr.mxu0 0.0
    %352 = vmatpush1.msra.mxu0 %v256
    %353 = vmatprep.subr.mxu0 0.0
    %354 = vmatpush1.msra.mxu0 %v257
    %355 = vmatprep.subr.mxu0 0.0
    %356 = vmatpush1.msra.mxu0 %v258
    %357 = vmatprep.subr.mxu0 0.0
    %358 = vmatpush1.msra.mxu0 %v259
    %359 = vmatprep.subr.mxu0 0.0
    %360 = vmatpush1.msra.mxu0 %v260
    %361 = vmatprep.subr.mxu0 0.0
    %362 = vmatpush1.msra.mxu0 %v261
    %363 = vmatprep.subr.mxu0 0.0
    %364 = vmatpush1.msra.mxu0 %v262
    %365 = vmatprep.subr.mxu0 0.0
    %366 = vmatpush1.msra.mxu0 %v263
    %367 = vmatprep.subr.mxu0 0.0
    %368 = vmatpush1.msra.mxu0 %v264
    %369 = vmatprep.subr.mxu0 0.0
    %370 = vmatpush1.msra.mxu0 %v265
    %371 = vmatprep.subr.mxu0 0.0
    %372 = vmatpush1.msra.mxu0 %v266
    %373 = vmatprep.subr.mxu0 0.0
    %374 = vmatpush1.msra.mxu0 0.0
    %375 = vmatprep.subr.mxu0 0.0
    %376 = vmatpush1.msra.mxu0 0.0
    %377 = vmatprep.subr.mxu0 0.0
    %378 = vmatpush1.msra.mxu0 0.0
    %379 = vmatprep.subr.mxu0 0.0
    %380 = vmatpush1.msra.mxu0 0.0
    %381 = vmatprep.subr.mxu0 0.0
    %382 = vmatpush1.msra.mxu0 0.0
    %383 = vmatprep.subr.mxu0 0.0
    %384 = vmatpush1.msra.mxu0 0.0
    %385 = vmatprep.subr.mxu0 0.0
    %386 = vmatpush1.msra.mxu0 0.0
    %387 = vmatprep.subr.mxu0 0.0
    %388 = vmatpush1.msra.mxu0 0.0
    %389 = vmatprep.subr.mxu0 0.0
    %390 = vmatpush1.msra.mxu0 0.0
    %391 = vmatprep.subr.mxu0 0.0
    %392 = vmatpush1.msra.mxu0 0.0
    %393 = vmatprep.subr.mxu0 0.0
    %394 = vmatpush1.msra.mxu0 0.0
    %395 = vmatprep.subr.mxu0 0.0
    %396 = vmatpush1.msra.mxu0 0.0
    %397 = vmatprep.subr.mxu0 0.0
    %398 = vmatpush1.msra.mxu0 0.0
    %399 = vmatprep.subr.mxu0 0.0
    %400 = vmatpush1.msra.mxu0 0.0
    %401 = vmatprep.subr.mxu0 0.0
    %402 = vmatpush1.msra.mxu0 0.0
    %403 = vmatprep.subr.mxu0 0.0
    %404 = vmatpush1.msra.mxu0 0.0
    %405 = vmatprep.mubr.f32.mxu0 0.0
    %406 = vmatmul.mubr.f32.gmra.mrb[0].mxu0 %v336
    %v407 = vpop.f32.mrb[0].mxu0
    %v408 = vadd.f32 %v340, %v407
    %v409 = vpop.f32.mrb[0].mxu0
    %410 = vdwg.mxu0
    %411 = vst [vmem:[#allocation4 + $0x8] sm:$0xff] %v408
    %v412 = vld [vmem:[#allocation3 + $0x20] sm:$0xff]
    %413 = vmatprep.subr.mxu0 0.0
    %414 = vmatpush1.msra.mxu0 %v251
    %415 = vmatprep.subr.mxu0 0.0
    %416 = vmatpush1.msra.mxu0 %v252
    %417 = vmatprep.subr.mxu0 0.0
    %418 = vmatpush1.msra.mxu0 %v253
    %419 = vmatprep.subr.mxu0 0.0
    %420 = vmatpush1.msra.mxu0 %v254
    %421 = vmatprep.subr.mxu0 0.0
    %422 = vmatpush1.msra.mxu0 %v255
    %423 = vmatprep.subr.mxu0 0.0
    %424 = vmatpush1.msra.mxu0 %v256
    %425 = vmatprep.subr.mxu0 0.0
    %426 = vmatpush1.msra.mxu0 %v257
    %427 = vmatprep.subr.mxu0 0.0
    %428 = vmatpush1.msra.mxu0 %v258
    %429 = vmatprep.subr.mxu0 0.0
    %430 = vmatpush1.msra.mxu0 %v259
    %431 = vmatprep.subr.mxu0 0.0
    %432 = vmatpush1.msra.mxu0 %v260
    %433 = vmatprep.subr.mxu0 0.0
    %434 = vmatpush1.msra.mxu0 %v261
    %435 = vmatprep.subr.mxu0 0.0
    %436 = vmatpush1.msra.mxu0 %v262
    %437 = vmatprep.subr.mxu0 0.0
    %438 = vmatpush1.msra.mxu0 %v263
    %439 = vmatprep.subr.mxu0 0.0
    %440 = vmatpush1.msra.mxu0 %v264
    %441 = vmatprep.subr.mxu0 0.0
    %442 = vmatpush1.msra.mxu0 %v265
    %443 = vmatprep.subr.mxu0 0.0
    %444 = vmatpush1.msra.mxu0 %v266
    %445 = vmatprep.subr.mxu0 0.0
    %446 = vmatpush1.msra.mxu0 0.0
    %447 = vmatprep.subr.mxu0 0.0
    %448 = vmatpush1.msra.mxu0 0.0
    %449 = vmatprep.subr.mxu0 0.0
    %450 = vmatpush1.msra.mxu0 0.0
    %451 = vmatprep.subr.mxu0 0.0
    %452 = vmatpush1.msra.mxu0 0.0
    %453 = vmatprep.subr.mxu0 0.0
    %454 = vmatpush1.msra.mxu0 0.0
    %455 = vmatprep.subr.mxu0 0.0
    %456 = vmatpush1.msra.mxu0 0.0
    %457 = vmatprep.subr.mxu0 0.0
    %458 = vmatpush1.msra.mxu0 0.0
    %459 = vmatprep.subr.mxu0 0.0
    %460 = vmatpush1.msra.mxu0 0.0
    %461 = vmatprep.subr.mxu0 0.0
    %462 = vmatpush1.msra.mxu0 0.0
    %463 = vmatprep.subr.mxu0 0.0
    %464 = vmatpush1.msra.mxu0 0.0
    %465 = vmatprep.subr.mxu0 0.0
    %466 = vmatpush1.msra.mxu0 0.0
    %467 = vmatprep.subr.mxu0 0.0
    %468 = vmatpush1.msra.mxu0 0.0
    %469 = vmatprep.subr.mxu0 0.0
    %470 = vmatpush1.msra.mxu0 0.0
    %471 = vmatprep.subr.mxu0 0.0
    %472 = vmatpush1.msra.mxu0 0.0
    %473 = vmatprep.subr.mxu0 0.0
    %474 = vmatpush1.msra.mxu0 0.0
    %475 = vmatprep.subr.mxu0 0.0
    %476 = vmatpush1.msra.mxu0 0.0
    %477 = vmatprep.mubr.f32.mxu0 0.0
    %478 = vmatmul.mubr.f32.gmra.mrb[0].mxu0 %v408
    %v479 = vpop.f32.mrb[0].mxu0
    %v480 = vadd.f32 %v412, %v479
    %v481 = vpop.f32.mrb[0].mxu0
    %482 = vdwg.mxu0
    %483 = vst [vmem:[#allocation4 + $0x10] sm:$0xff] %v480
    %v484 = vld [vmem:[#allocation3 + $0x30] sm:$0xff]
    %485 = vmatprep.subr.mxu0 0.0
    %486 = vmatpush1.msra.mxu0 %v251
    %487 = vmatprep.subr.mxu0 0.0
    %488 = vmatpush1.msra.mxu0 %v252
    %489 = vmatprep.subr.mxu0 0.0
    %490 = vmatpush1.msra.mxu0 %v253
    %491 = vmatprep.subr.mxu0 0.0
    %492 = vmatpush1.msra.mxu0 %v254
    %493 = vmatprep.subr.mxu0 0.0
    %494 = vmatpush1.msra.mxu0 %v255
    %495 = vmatprep.subr.mxu0 0.0
    %496 = vmatpush1.msra.mxu0 %v256
    %497 = vmatprep.subr.mxu0 0.0
    %498 = vmatpush1.msra.mxu0 %v257
    %499 = vmatprep.subr.mxu0 0.0
    %500 = vmatpush1.msra.mxu0 %v258
    %501 = vmatprep.subr.mxu0 0.0
    %502 = vmatpush1.msra.mxu0 %v259
    %503 = vmatprep.subr.mxu0 0.0
    %504 = vmatpush1.msra.mxu0 %v260
    %505 = vmatprep.subr.mxu0 0.0
    %506 = vmatpush1.msra.mxu0 %v261
    %507 = vmatprep.subr.mxu0 0.0
    %508 = vmatpush1.msra.mxu0 %v262
    %509 = vmatprep.subr.mxu0 0.0
    %510 = vmatpush1.msra.mxu0 %v263
    %511 = vmatprep.subr.mxu0 0.0
    %512 = vmatpush1.msra.mxu0 %v264
    %513 = vmatprep.subr.mxu0 0.0
    %514 = vmatpush1.msra.mxu0 %v265
    %515 = vmatprep.subr.mxu0 0.0
    %516 = vmatpush1.msra.mxu0 %v266
    %517 = vmatprep.subr.mxu0 0.0
    %518 = vmatpush1.msra.mxu0 0.0
    %519 = vmatprep.subr.mxu0 0.0
    %520 = vmatpush1.msra.mxu0 0.0
    %521 = vmatprep.subr.mxu0 0.0
    %522 = vmatpush1.msra.mxu0 0.0
    %523 = vmatprep.subr.mxu0 0.0
    %524 = vmatpush1.msra.mxu0 0.0
    %525 = vmatprep.subr.mxu0 0.0
    %526 = vmatpush1.msra.mxu0 0.0
    %527 = vmatprep.subr.mxu0 0.0
    %528 = vmatpush1.msra.mxu0 0.0
    %529 = vmatprep.subr.mxu0 0.0
    %530 = vmatpush1.msra.mxu0 0.0
    %531 = vmatprep.subr.mxu0 0.0
    %532 = vmatpush1.msra.mxu0 0.0
    %533 = vmatprep.subr.mxu0 0.0
    %534 = vmatpush1.msra.mxu0 0.0
    %535 = vmatprep.subr.mxu0 0.0
    %536 = vmatpush1.msra.mxu0 0.0
    %537 = vmatprep.subr.mxu0 0.0
    %538 = vmatpush1.msra.mxu0 0.0
    %539 = vmatprep.subr.mxu0 0.0
    %540 = vmatpush1.msra.mxu0 0.0
    %541 = vmatprep.subr.mxu0 0.0
    %542 = vmatpush1.msra.mxu0 0.0
    %543 = vmatprep.subr.mxu0 0.0
    %544 = vmatpush1.msra.mxu0 0.0
    %545 = vmatprep.subr.mxu0 0.0
    %546 = vmatpush1.msra.mxu0 0.0
    %547 = vmatprep.subr.mxu0 0.0
    %548 = vmatpush1.msra.mxu0 0.0
    %549 = vmatprep.mubr.f32.mxu0 0.0
    %550 = vmatmul.mubr.f32.gmra.mrb[0].mxu0 %v480
    %v551 = vpop.f32.mrb[0].mxu0
    %v552 = vadd.f32 %v484, %v551
    %v553 = vpop.f32.mrb[0].mxu0
    %554 = vdwg.mxu0
    %555 = vst [vmem:[#allocation4 + $0x18] sm:$0xff] %v552
    %v556 = vld [vmem:[#allocation3 + $0x40] sm:$0xff]
    %557 = vmatprep.subr.mxu0 0.0
    %558 = vmatpush1.msra.mxu0 %v251
    %559 = vmatprep.subr.mxu0 0.0
    %560 = vmatpush1.msra.mxu0 %v252
    %561 = vmatprep.subr.mxu0 0.0
    %562 = vmatpush1.msra.mxu0 %v253
    %563 = vmatprep.subr.mxu0 0.0
    %564 = vmatpush1.msra.mxu0 %v254
    %565 = vmatprep.subr.mxu0 0.0
    %566 = vmatpush1.msra.mxu0 %v255
    %567 = vmatprep.subr.mxu0 0.0
    %568 = vmatpush1.msra.mxu0 %v256
    %569 = vmatprep.subr.mxu0 0.0
    %570 = vmatpush1.msra.mxu0 %v257
    %571 = vmatprep.subr.mxu0 0.0
    %572 = vmatpush1.msra.mxu0 %v258
    %573 = vmatprep.subr.mxu0 0.0
    %574 = vmatpush1.msra.mxu0 %v259
    %575 = vmatprep.subr.mxu0 0.0
    %576 = vmatpush1.msra.mxu0 %v260
    %577 = vmatprep.subr.mxu0 0.0
    %578 = vmatpush1.msra.mxu0 %v261
    %579 = vmatprep.subr.mxu0 0.0
    %580 = vmatpush1.msra.mxu0 %v262
    %581 = vmatprep.subr.mxu0 0.0
    %582 = vmatpush1.msra.mxu0 %v263
    %583 = vmatprep.subr.mxu0 0.0
    %584 = vmatpush1.msra.mxu0 %v264
    %585 = vmatprep.subr.mxu0 0.0
    %586 = vmatpush1.msra.mxu0 %v265
    %587 = vmatprep.subr.mxu0 0.0
    %588 = vmatpush1.msra.mxu0 %v266
    %589 = vmatprep.subr.mxu0 0.0
    %590 = vmatpush1.msra.mxu0 0.0
    %591 = vmatprep.subr.mxu0 0.0
    %592 = vmatpush1.msra.mxu0 0.0
    %593 = vmatprep.subr.mxu0 0.0
    %594 = vmatpush1.msra.mxu0 0.0
    %595 = vmatprep.subr.mxu0 0.0
    %596 = vmatpush1.msra.mxu0 0.0
    %597 = vmatprep.subr.mxu0 0.0
    %598 = vmatpush1.msra.mxu0 0.0
    %599 = vmatprep.subr.mxu0 0.0
    %600 = vmatpush1.msra.mxu0 0.0
    %601 = vmatprep.subr.mxu0 0.0
    %602 = vmatpush1.msra.mxu0 0.0
    %603 = vmatprep.subr.mxu0 0.0
    %604 = vmatpush1.msra.mxu0 0.0
    %605 = vmatprep.subr.mxu0 0.0
    %606 = vmatpush1.msra.mxu0 0.0
    %607 = vmatprep.subr.mxu0 0.0
    %608 = vmatpush1.msra.mxu0 0.0
    %609 = vmatprep.subr.mxu0 0.0
    %610 = vmatpush1.msra.mxu0 0.0
    %611 = vmatprep.subr.mxu0 0.0
    %612 = vmatpush1.msra.mxu0 0.0
    %613 = vmatprep.subr.mxu0 0.0
    %614 = vmatpush1.msra.mxu0 0.0
    %615 = vmatprep.subr.mxu0 0.0
    %616 = vmatpush1.msra.mxu0 0.0
    %617 = vmatprep.subr.mxu0 0.0
    %618 = vmatpush1.msra.mxu0 0.0
    %619 = vmatprep.subr.mxu0 0.0
    %620 = vmatpush1.msra.mxu0 0.0
    %621 = vmatprep.mubr.f32.mxu0 0.0
    %622 = vmatmul.mubr.f32.gmra.mrb[0].mxu0 %v552
    %v623 = vpop.f32.mrb[0].mxu0
    %v624 = vadd.f32 %v556, %v623
    %v625 = vpop.f32.mrb[0].mxu0
    %626 = vdwg.mxu0
    %627 = vst [vmem:[#allocation4 + $0x20] sm:$0xff] %v624
    %v628 = vld [vmem:[#allocation3 + $0x50] sm:$0xff]
    %629 = vmatprep.subr.mxu0 0.0
    %630 = vmatpush1.msra.mxu0 %v251
    %631 = vmatprep.subr.mxu0 0.0
    %632 = vmatpush1.msra.mxu0 %v252
    %633 = vmatprep.subr.mxu0 0.0
    %634 = vmatpush1.msra.mxu0 %v253
    %635 = vmatprep.subr.mxu0 0.0
    %636 = vmatpush1.msra.mxu0 %v254
    %637 = vmatprep.subr.mxu0 0.0
    %638 = vmatpush1.msra.mxu0 %v255
    %639 = vmatprep.subr.mxu0 0.0
    %640 = vmatpush1.msra.mxu0 %v256
    %641 = vmatprep.subr.mxu0 0.0
    %642 = vmatpush1.msra.mxu0 %v257
    %643 = vmatprep.subr.mxu0 0.0
    %644 = vmatpush1.msra.mxu0 %v258
    %645 = vmatprep.subr.mxu0 0.0
    %646 = vmatpush1.msra.mxu0 %v259
    %647 = vmatprep.subr.mxu0 0.0
    %648 = vmatpush1.msra.mxu0 %v260
    %649 = vmatprep.subr.mxu0 0.0
    %650 = vmatpush1.msra.mxu0 %v261
    %651 = vmatprep.subr.mxu0 0.0
    %652 = vmatpush1.msra.mxu0 %v262
    %653 = vmatprep.subr.mxu0 0.0
    %654 = vmatpush1.msra.mxu0 %v263
    %655 = vmatprep.subr.mxu0 0.0
    %656 = vmatpush1.msra.mxu0 %v264
    %657 = vmatprep.subr.mxu0 0.0
    %658 = vmatpush1.msra.mxu0 %v265
    %659 = vmatprep.subr.mxu0 0.0
    %660 = vmatpush1.msra.mxu0 %v266
    %661 = vmatprep.subr.mxu0 0.0
    %662 = vmatpush1.msra.mxu0 0.0
    %663 = vmatprep.subr.mxu0 0.0
    %664 = vmatpush1.msra.mxu0 0.0
    %665 = vmatprep.subr.mxu0 0.0
    %666 = vmatpush1.msra.mxu0 0.0
    %667 = vmatprep.subr.mxu0 0.0
    %668 = vmatpush1.msra.mxu0 0.0
    %669 = vmatprep.subr.mxu0 0.0
    %670 = vmatpush1.msra.mxu0 0.0
    %671 = vmatprep.subr.mxu0 0.0
    %672 = vmatpush1.msra.mxu0 0.0
    %673 = vmatprep.subr.mxu0 0.0
    %674 = vmatpush1.msra.mxu0 0.0
    %675 = vmatprep.subr.mxu0 0.0
    %676 = vmatpush1.msra.mxu0 0.0
    %677 = vmatprep.subr.mxu0 0.0
    %678 = vmatpush1.msra.mxu0 0.0
    %679 = vmatprep.subr.mxu0 0.0
    %680 = vmatpush1.msra.mxu0 0.0
    %681 = vmatprep.subr.mxu0 0.0
    %682 = vmatpush1.msra.mxu0 0.0
    %683 = vmatprep.subr.mxu0 0.0
    %684 = vmatpush1.msra.mxu0 0.0
    %685 = vmatprep.subr.mxu0 0.0
    %686 = vmatpush1.msra.mxu0 0.0
    %687 = vmatprep.subr.mxu0 0.0
    %688 = vmatpush1.msra.mxu0 0.0
    %689 = vmatprep.subr.mxu0 0.0
    %690 = vmatpush1.msra.mxu0 0.0
    %691 = vmatprep.subr.mxu0 0.0
    %692 = vmatpush1.msra.mxu0 0.0
    %693 = vmatprep.mubr.f32.mxu0 0.0
    %694 = vmatmul.mubr.f32.gmra.mrb[0].mxu0 %v624
    %v695 = vpop.f32.mrb[0].mxu0
    %v696 = vadd.f32 %v628, %v695
    %v697 = vpop.f32.mrb[0].mxu0
    %698 = vdwg.mxu0
    %699 = vst [vmem:[#allocation4 + $0x28] sm:$0xff] %v696
    %v700 = vld [vmem:[#allocation3 + $0x60] sm:$0xff]
    %701 = vmatprep.subr.mxu0 0.0
    %702 = vmatpush1.msra.mxu0 %v251
    %703 = vmatprep.subr.mxu0 0.0
    %704 = vmatpush1.msra.mxu0 %v252
    %705 = vmatprep.subr.mxu0 0.0
    %706 = vmatpush1.msra.mxu0 %v253
    %707 = vmatprep.subr.mxu0 0.0
    %708 = vmatpush1.msra.mxu0 %v254
    %709 = vmatprep.subr.mxu0 0.0
    %710 = vmatpush1.msra.mxu0 %v255
    %711 = vmatprep.subr.mxu0 0.0
    %712 = vmatpush1.msra.mxu0 %v256
    %713 = vmatprep.subr.mxu0 0.0
    %714 = vmatpush1.msra.mxu0 %v257
    %715 = vmatprep.subr.mxu0 0.0
    %716 = vmatpush1.msra.mxu0 %v258
    %717 = vmatprep.subr.mxu0 0.0
    %718 = vmatpush1.msra.mxu0 %v259
    %719 = vmatprep.subr.mxu0 0.0
    %720 = vmatpush1.msra.mxu0 %v260
    %721 = vmatprep.subr.mxu0 0.0
    %722 = vmatpush1.msra.mxu0 %v261
    %723 = vmatprep.subr.mxu0 0.0
    %724 = vmatpush1.msra.mxu0 %v262
    %725 = vmatprep.subr.mxu0 0.0
    %726 = vmatpush1.msra.mxu0 %v263
    %727 = vmatprep.subr.mxu0 0.0
    %728 = vmatpush1.msra.mxu0 %v264
    %729 = vmatprep.subr.mxu0 0.0
    %730 = vmatpush1.msra.mxu0 %v265
    %731 = vmatprep.subr.mxu0 0.0
    %732 = vmatpush1.msra.mxu0 %v266
    %733 = vmatprep.subr.mxu0 0.0
    %734 = vmatpush1.msra.mxu0 0.0
    %735 = vmatprep.subr.mxu0 0.0
    %736 = vmatpush1.msra.mxu0 0.0
    %737 = vmatprep.subr.mxu0 0.0
    %738 = vmatpush1.msra.mxu0 0.0
    %739 = vmatprep.subr.mxu0 0.0
    %740 = vmatpush1.msra.mxu0 0.0
    %741 = vmatprep.subr.mxu0 0.0
    %742 = vmatpush1.msra.mxu0 0.0
    %743 = vmatprep.subr.mxu0 0.0
    %744 = vmatpush1.msra.mxu0 0.0
    %745 = vmatprep.subr.mxu0 0.0
    %746 = vmatpush1.msra.mxu0 0.0
    %747 = vmatprep.subr.mxu0 0.0
    %748 = vmatpush1.msra.mxu0 0.0
    %749 = vmatprep.subr.mxu0 0.0
    %750 = vmatpush1.msra.mxu0 0.0
    %751 = vmatprep.subr.mxu0 0.0
    %752 = vmatpush1.msra.mxu0 0.0
    %753 = vmatprep.subr.mxu0 0.0
    %754 = vmatpush1.msra.mxu0 0.0
    %755 = vmatprep.subr.mxu0 0.0
    %756 = vmatpush1.msra.mxu0 0.0
    %757 = vmatprep.subr.mxu0 0.0
    %758 = vmatpush1.msra.mxu0 0.0
    %759 = vmatprep.subr.mxu0 0.0
    %760 = vmatpush1.msra.mxu0 0.0
    %761 = vmatprep.subr.mxu0 0.0
    %762 = vmatpush1.msra.mxu0 0.0
    %763 = vmatprep.subr.mxu0 0.0
    %764 = vmatpush1.msra.mxu0 0.0
    %765 = vmatprep.mubr.f32.mxu0 0.0
    %766 = vmatmul.mubr.f32.gmra.mrb[0].mxu0 %v696
    %v767 = vpop.f32.mrb[0].mxu0
    %v768 = vadd.f32 %v700, %v767
    %v769 = vpop.f32.mrb[0].mxu0
    %770 = vdwg.mxu0
    %771 = vst [vmem:[#allocation4 + $0x30] sm:$0xff] %v768
    %v772 = vld [vmem:[#allocation3 + $0x70] sm:$0xff]
    %773 = vmatprep.subr.mxu0 0.0
    %774 = vmatpush1.msra.mxu0 %v251
    %775 = vmatprep.subr.mxu0 0.0
    %776 = vmatpush1.msra.mxu0 %v252
    %777 = vmatprep.subr.mxu0 0.0
    %778 = vmatpush1.msra.mxu0 %v253
    %779 = vmatprep.subr.mxu0 0.0
    %780 = vmatpush1.msra.mxu0 %v254
    %781 = vmatprep.subr.mxu0 0.0
    %782 = vmatpush1.msra.mxu0 %v255
    %783 = vmatprep.subr.mxu0 0.0
    %784 = vmatpush1.msra.mxu0 %v256
    %785 = vmatprep.subr.mxu0 0.0
    %786 = vmatpush1.msra.mxu0 %v257
    %787 = vmatprep.subr.mxu0 0.0
    %788 = vmatpush1.msra.mxu0 %v258
    %789 = vmatprep.subr.mxu0 0.0
    %790 = vmatpush1.msra.mxu0 %v259
    %791 = vmatprep.subr.mxu0 0.0
    %792 = vmatpush1.msra.mxu0 %v260
    %793 = vmatprep.subr.mxu0 0.0
    %794 = vmatpush1.msra.mxu0 %v261
    %795 = vmatprep.subr.mxu0 0.0
    %796 = vmatpush1.msra.mxu0 %v262
    %797 = vmatprep.subr.mxu0 0.0
    %798 = vmatpush1.msra.mxu0 %v263
    %799 = vmatprep.subr.mxu0 0.0
    %800 = vmatpush1.msra.mxu0 %v264
    %801 = vmatprep.subr.mxu0 0.0
    %802 = vmatpush1.msra.mxu0 %v265
    %803 = vmatprep.subr.mxu0 0.0
    %804 = vmatpush1.msra.mxu0 %v266
    %805 = vmatprep.subr.mxu0 0.0
    %806 = vmatpush1.msra.mxu0 0.0
    %807 = vmatprep.subr.mxu0 0.0
    %808 = vmatpush1.msra.mxu0 0.0
    %809 = vmatprep.subr.mxu0 0.0
    %810 = vmatpush1.msra.mxu0 0.0
    %811 = vmatprep.subr.mxu0 0.0
    %812 = vmatpush1.msra.mxu0 0.0
    %813 = vmatprep.subr.mxu0 0.0
    %814 = vmatpush1.msra.mxu0 0.0
    %815 = vmatprep.subr.mxu0 0.0
    %816 = vmatpush1.msra.mxu0 0.0
    %817 = vmatprep.subr.mxu0 0.0
    %818 = vmatpush1.msra.mxu0 0.0
    %819 = vmatprep.subr.mxu0 0.0
    %820 = vmatpush1.msra.mxu0 0.0
    %821 = vmatprep.subr.mxu0 0.0
    %822 = vmatpush1.msra.mxu0 0.0
    %823 = vmatprep.subr.mxu0 0.0
    %824 = vmatpush1.msra.mxu0 0.0
    %825 = vmatprep.subr.mxu0 0.0
    %826 = vmatpush1.msra.mxu0 0.0
    %827 = vmatprep.subr.mxu0 0.0
    %828 = vmatpush1.msra.mxu0 0.0
    %829 = vmatprep.subr.mxu0 0.0
    %830 = vmatpush1.msra.mxu0 0.0
    %831 = vmatprep.subr.mxu0 0.0
    %832 = vmatpush1.msra.mxu0 0.0
    %833 = vmatprep.subr.mxu0 0.0
    %834 = vmatpush1.msra.mxu0 0.0
    %835 = vmatprep.subr.mxu0 0.0
    %836 = vmatpush1.msra.mxu0 0.0
    %837 = vmatprep.mubr.f32.mxu0 0.0
    %838 = vmatmul.mubr.f32.gmra.mrb[0].mxu0 %v768
    %v839 = vpop.f32.mrb[0].mxu0
    %v840 = vadd.f32 %v772, %v839
    %v841 = vpop.f32.mrb[0].mxu0
    %842 = vdwg.mxu0
    %843 = vst [vmem:[#allocation4 + $0x38] sm:$0xff] %v840
    %844 = vst [vmem:[#allocation2] sm:$0xff] %v840
    %v845 = vld [vmem:[#allocation4] sm:$0xff]
    %v846 = vld [vmem:[#allocation4 + $0x8] sm:$0xff]
    %v847 = vld [vmem:[#allocation4 + $0x10] sm:$0xff]
    %v848 = vld [vmem:[#allocation4 + $0x18] sm:$0xff]
    %v849 = vld [vmem:[#allocation4 + $0x20] sm:$0xff]
    %v850 = vld [vmem:[#allocation4 + $0x28] sm:$0xff]
    %v851 = vld [vmem:[#allocation4 + $0x30] sm:$0xff]
    %v852 = vld [vmem:[#allocation4 + $0x38] sm:$0xff]
    %v853 = vld [vmem:[#allocation10] sm:$0xff]
    %v854 = vld [vmem:[#allocation10 + $0x8] sm:$0xff]
    %v855 = vld [vmem:[#allocation10 + $0x10] sm:$0xff]
    %v856 = vld [vmem:[#allocation10 + $0x18] sm:$0xff]
    %v857 = vld [vmem:[#allocation10 + $0x20] sm:$0xff]
    %v858 = vld [vmem:[#allocation10 + $0x28] sm:$0xff]
    %v859 = vld [vmem:[#allocation10 + $0x30] sm:$0xff]
    %v860 = vld [vmem:[#allocation10 + $0x38] sm:$0xff]
    %v861 = vld [vmem:[#allocation10 + $0x40] sm:$0xff]
    %v862 = vld [vmem:[#allocation10 + $0x48] sm:$0xff]
    %v863 = vld [vmem:[#allocation10 + $0x50] sm:$0xff]
    %v864 = vld [vmem:[#allocation10 + $0x58] sm:$0xff]
    %v865 = vld [vmem:[#allocation10 + $0x60] sm:$0xff]
    %v866 = vld [vmem:[#allocation10 + $0x68] sm:$0xff]
    %v867 = vld [vmem:[#allocation10 + $0x70] sm:$0xff]
    %v868 = vld [vmem:[#allocation10 + $0x78] sm:$0xff]
    %v869 = vld [vmem:[#allocation3 + $0x8] sm:$0xff]
    %v870 = vld [vmem:[#allocation3 + $0x18] sm:$0xff]
    %v871 = vld [vmem:[#allocation3 + $0x28] sm:$0xff]
    %v872 = vld [vmem:[#allocation3 + $0x38] sm:$0xff]
    %v873 = vld [vmem:[#allocation3 + $0x48] sm:$0xff]
    %v874 = vld [vmem:[#allocation3 + $0x58] sm:$0xff]
    %v875 = vld [vmem:[#allocation3 + $0x68] sm:$0xff]
    %v876 = vld [vmem:[#allocation3 + $0x78] sm:$0xff]
    %877 = vmatprep.subr.mxu0 0.0
    %878 = vmatpush1.msra.mxu0 %v853
    %879 = vmatprep.subr.mxu0 0.0
    %880 = vmatpush1.msra.mxu0 %v854
    %881 = vmatprep.subr.mxu0 0.0
    %882 = vmatpush1.msra.mxu0 %v855
    %883 = vmatprep.subr.mxu0 0.0
    %884 = vmatpush1.msra.mxu0 %v856
    %885 = vmatprep.subr.mxu0 0.0
    %886 = vmatpush1.msra.mxu0 %v857
    %887 = vmatprep.subr.mxu0 0.0
    %888 = vmatpush1.msra.mxu0 %v858
    %889 = vmatprep.subr.mxu0 0.0
    %890 = vmatpush1.msra.mxu0 %v859
    %891 = vmatprep.subr.mxu0 0.0
    %892 = vmatpush1.msra.mxu0 %v860
    %893 = vmatprep.subr.mxu0 0.0
    %894 = vmatpush1.msra.mxu0 %v861
    %895 = vmatprep.subr.mxu0 0.0
    %896 = vmatpush1.msra.mxu0 %v862
    %897 = vmatprep.subr.mxu0 0.0
    %898 = vmatpush1.msra.mxu0 %v863
    %899 = vmatprep.subr.mxu0 0.0
    %900 = vmatpush1.msra.mxu0 %v864
    %901 = vmatprep.subr.mxu0 0.0
    %902 = vmatpush1.msra.mxu0 %v865
    %903 = vmatprep.subr.mxu0 0.0
    %904 = vmatpush1.msra.mxu0 %v866
    %905 = vmatprep.subr.mxu0 0.0
    %906 = vmatpush1.msra.mxu0 %v867
    %907 = vmatprep.subr.mxu0 0.0
    %908 = vmatpush1.msra.mxu0 %v868
    %909 = vmatprep.subr.mxu0 0.0
    %910 = vmatpush1.msra.mxu0 0.0
    %911 = vmatprep.subr.mxu0 0.0
    %912 = vmatpush1.msra.mxu0 0.0
    %913 = vmatprep.subr.mxu0 0.0
    %914 = vmatpush1.msra.mxu0 0.0
    %915 = vmatprep.subr.mxu0 0.0
    %916 = vmatpush1.msra.mxu0 0.0
    %917 = vmatprep.subr.mxu0 0.0
    %918 = vmatpush1.msra.mxu0 0.0
    %919 = vmatprep.subr.mxu0 0.0
    %920 = vmatpush1.msra.mxu0 0.0
    %921 = vmatprep.subr.mxu0 0.0
    %922 = vmatpush1.msra.mxu0 0.0
    %923 = vmatprep.subr.mxu0 0.0
    %924 = vmatpush1.msra.mxu0 0.0
    %925 = vmatprep.subr.mxu0 0.0
    %926 = vmatpush1.msra.mxu0 0.0
    %927 = vmatprep.subr.mxu0 0.0
    %928 = vmatpush1.msra.mxu0 0.0
    %929 = vmatprep.subr.mxu0 0.0
    %930 = vmatpush1.msra.mxu0 0.0
    %931 = vmatprep.subr.mxu0 0.0
    %932 = vmatpush1.msra.mxu0 0.0
    %933 = vmatprep.subr.mxu0 0.0
    %934 = vmatpush1.msra.mxu0 0.0
    %935 = vmatprep.subr.mxu0 0.0
    %936 = vmatpush1.msra.mxu0 0.0
    %937 = vmatprep.subr.mxu0 0.0
    %938 = vmatpush1.msra.mxu0 0.0
    %939 = vmatprep.subr.mxu0 0.0
    %940 = vmatpush1.msra.mxu0 0.0
    %941 = vmatprep.mubr.f32.mxu0 0.0
    %942 = vmatmul.mubr.f32.gmra.mrb[0].mxu0 %v845
    %v943 = vpop.f32.mrb[0].mxu0
    %v944 = vadd.f32 %v869, %v943
    %v945 = vpop.f32.mrb[0].mxu0
    %946 = vmatprep.mubr.f32.mxu0 0.0
    %947 = vmatmul.mubr.f32.gmra.mrb[0].mxu0 %v846
    %v948 = vpop.f32.mrb[0].mxu0
    %v949 = vadd.f32 %v870, %v948
    %v950 = vpop.f32.mrb[0].mxu0
    %951 = vmatprep.mubr.f32.mxu0 0.0
    %952 = vmatmul.mubr.f32.gmra.mrb[0].mxu0 %v847
    %v953 = vpop.f32.mrb[0].mxu0
    %v954 = vadd.f32 %v871, %v953
    %v955 = vpop.f32.mrb[0].mxu0
    %956 = vmatprep.mubr.f32.mxu0 0.0
    %957 = vmatmul.mubr.f32.gmra.mrb[0].mxu0 %v848
    %v958 = vpop.f32.mrb[0].mxu0
    %v959 = vadd.f32 %v872, %v958
    %v960 = vpop.f32.mrb[0].mxu0
    %961 = vmatprep.mubr.f32.mxu0 0.0
    %962 = vmatmul.mubr.f32.gmra.mrb[0].mxu0 %v849
    %v963 = vpop.f32.mrb[0].mxu0
    %v964 = vadd.f32 %v873, %v963
    %v965 = vpop.f32.mrb[0].mxu0
    %966 = vmatprep.mubr.f32.mxu0 0.0
    %967 = vmatmul.mubr.f32.gmra.mrb[0].mxu0 %v850
    %v968 = vpop.f32.mrb[0].mxu0
    %v969 = vadd.f32 %v874, %v968
    %v970 = vpop.f32.mrb[0].mxu0
    %971 = vmatprep.mubr.f32.mxu0 0.0
    %972 = vmatmul.mubr.f32.gmra.mrb[0].mxu0 %v851
    %v973 = vpop.f32.mrb[0].mxu0
    %v974 = vadd.f32 %v875, %v973
    %v975 = vpop.f32.mrb[0].mxu0
    %976 = vmatprep.mubr.f32.mxu0 0.0
    %977 = vmatmul.mubr.f32.gmra.mrb[0].mxu0 %v852
    %v978 = vpop.f32.mrb[0].mxu0
    %v979 = vadd.f32 %v876, %v978
    %v980 = vpop.f32.mrb[0].mxu0
    %981 = vdwg.mxu0
    %982 = vst [vmem:[#allocation13] sm:$0xff] %v944
    %983 = vst [vmem:[#allocation13 + $0x8] sm:$0xff] %v949
    %984 = vst [vmem:[#allocation13 + $0x10] sm:$0xff] %v954
    %985 = vst [vmem:[#allocation13 + $0x18] sm:$0xff] %v959
    %986 = vst [vmem:[#allocation13 + $0x20] sm:$0xff] %v964
    %987 = vst [vmem:[#allocation13 + $0x28] sm:$0xff] %v969
    %988 = vst [vmem:[#allocation13 + $0x30] sm:$0xff] %v974
    %989 = vst [vmem:[#allocation13 + $0x38] sm:$0xff] %v979
    // Predicated region
    $region42: #{tpu_custom_call.1} parent=1 // pred_check
      _
    $region43: #{tpu_custom_call.1} parent=1 // pred_check_branch
      %991 = sbr.rel (0) target = $region45
    $region44: #{tpu_custom_call.1} parent=1 // pred_region
      %s993 = ssub.s32 1024, 1024
      %994 = vsyncadd [#allocation7], %s993
      %s995 = sshll.u32 [#allocation13], 4
      %s996 = int_to_ptr.vmem [resolvable:$true] %s995
      %1001 = dma.vmem_to_hbm [thread:$0]  %s996, 1024, %s5, [#allocation7], 128, 128, 8
    $region45: #{tpu_custom_call.1} parent=1 // pred_fallthru
      _
    // Predicated region
    $region46: #{tpu_custom_call.1} parent=1 // pred_check
      _
    $region47: #{tpu_custom_call.1} parent=1 // pred_check_branch
      %1003 = sbr.rel (0) target = $region49
    $region48: #{tpu_custom_call.1} parent=1 // pred_region
      %1004 = dma.done [#allocation7], 1024
    $region49: #{tpu_custom_call.1} parent=1 // pred_fallthru
      _
    %1005 = vsyncpa [#allocation6], 1
    %1006 = vsyncpa [#allocation9], 1
    %1007 = vsyncpa [#allocation12], 1
    %1008 = vsyncpa [#allocation7], 1

</llo_original>
